<compile_context>
chip_gen: v7x
topology: tpu7x:2x2x1
jax: 0.10.0
libtpu: 0.0.40
codegen_flags: <defaults>
</compile_context>

<pallas_src>
import functools

import numpy as np
import jax
import jax.numpy as jnp
from jax import lax
from jax.experimental import pallas as pl
from jax.experimental.pallas import tpu as pltpu


def _round_up(x, m):
    return (x + m - 1) // m * m


# -----------------------------------------------------------------------------
# Kernel A: per-channel pixel normalization  (x - mean[c]) * inv_std[c]
# x viewed (free reshape, no pad copy) as (C, L); tiled along L with 128-multiple
# lane blocks; mean / inv_std are (C, 1) columns broadcast across lanes.
# -----------------------------------------------------------------------------
def _normalize_kernel(x_ref, mean_ref, inv_std_ref, o_ref):
    o_ref[...] = (x_ref[...] - mean_ref[...]) * inv_std_ref[...]


def normalize_image(x, mean_c1, inv_std_c1):
    C, H, W = x.shape
    L = H * W
    x2 = x.astype(jnp.float32).reshape(C, L)          # contiguous view, no copy
    # ~512*128 elements per channel per block (well under scoped-VMEM defaults
    # on v5e/v6e/v7x even with double-buffering); edge block is OOB-masked.
    tl = min(_round_up(L, 128), 512 * 128)
    out = pl.pallas_call(
        _normalize_kernel,
        out_shape=jax.ShapeDtypeStruct((C, L), jnp.float32),
        grid_spec=pltpu.PrefetchScalarGridSpec(
            num_scalar_prefetch=0,
            grid=(pl.cdiv(L, tl),),
            in_specs=[
                pl.BlockSpec((C, tl), lambda i: (0, i)),
                pl.BlockSpec((C, 1), lambda i: (0, 0)),
                pl.BlockSpec((C, 1), lambda i: (0, 0)),
            ],
            out_specs=pl.BlockSpec((C, tl), lambda i: (0, i)),
        ),
        compiler_params=pltpu.CompilerParams(dimension_semantics=("parallel",)),
    )(x2, mean_c1, inv_std_c1)
    return out.reshape(C, H, W)


# -----------------------------------------------------------------------------
# Kernel B: bilinear resize (align_corners=False) via two MXU matmuls per
# channel; channels are a "parallel" grid axis, Ry / RxT are shared blocks.
# The cheaper matmul ordering is chosen per call.
# -----------------------------------------------------------------------------
def _resize_rx_first_kernel(x_ref, rxt_ref, ry_ref, o_ref):
    # x:(h,w) -> t = x @ RxT : (h,Wp) -> o = Ry @ t : (Ho,Wp)
    t = jnp.dot(x_ref[...], rxt_ref[...], preferred_element_type=jnp.float32)
    o_ref[...] = jnp.dot(ry_ref[...], t, preferred_element_type=jnp.float32)


def _resize_ry_first_kernel(x_ref, rxt_ref, ry_ref, o_ref):
    # x:(h,w) -> t = Ry @ x : (Ho,w) -> o = t @ RxT : (Ho,Wp)
    t = jnp.dot(ry_ref[...], x_ref[...], preferred_element_type=jnp.float32)
    o_ref[...] = jnp.dot(t, rxt_ref[...], preferred_element_type=jnp.float32)


@functools.lru_cache(maxsize=None)
def _interp_matrix(out_size, in_size):
    """Row-interp matrix matching torch F.interpolate bilinear, align_corners=False."""
    scale = in_size / out_size
    R = np.zeros((out_size, in_size), dtype=np.float32)
    for d in range(out_size):
        src = max((d + 0.5) * scale - 0.5, 0.0)
        i0 = min(int(np.floor(src)), in_size - 1)
        i1 = min(i0 + 1, in_size - 1)
        l1 = src - i0
        R[d, i0] += 1.0 - l1
        R[d, i1] += l1
    return R


@functools.lru_cache(maxsize=None)
def _resize_mats(out_h, out_w, h, w):
    """Device-resident interpolation matrices, cached per size key."""
    wp = _round_up(out_w, 128)                         # lane-dense output
    rx = _interp_matrix(out_w, w)                      # (Wo, w)
    rxt = np.zeros((w, wp), dtype=np.float32)
    rxt[:, :out_w] = rx.T
    ry = _interp_matrix(out_h, h)                      # (Ho, h)
    return jnp.asarray(rxt), jnp.asarray(ry), wp


def bilinear_resize(x, out_h, out_w):
    C, h, w = x.shape
    rxt, ry, wp = _resize_mats(out_h, out_w, h, w)
    # Apply the axis whose matmul yields fewer FLOPs / smaller intermediate first.
    flops_rx_first = h * wp * (w + out_h)
    flops_ry_first = out_h * w * (h + wp)
    kernel = (_resize_rx_first_kernel if flops_rx_first <= flops_ry_first
              else _resize_ry_first_kernel)
    # TODO(synk): for very large out_h additionally tile over output rows, and on
    # v6e/v7x cast operands to bf16 (f32 accum) with 256-aligned tiles (128 on v5e).
    out = pl.pallas_call(
        kernel,
        out_shape=jax.ShapeDtypeStruct((C, out_h, wp), jnp.float32),
        grid_spec=pltpu.PrefetchScalarGridSpec(
            num_scalar_prefetch=0,
            grid=(C,),
            in_specs=[
                pl.BlockSpec((None, h, w), lambda c: (c, 0, 0)),
                pl.BlockSpec((w, wp), lambda c: (0, 0)),
                pl.BlockSpec((out_h, h), lambda c: (0, 0)),
            ],
            out_specs=pl.BlockSpec((None, out_h, wp), lambda c: (c, 0, 0)),
        ),
        compiler_params=pltpu.CompilerParams(dimension_semantics=("parallel",)),
    )(x.astype(jnp.float32), rxt, ry)
    return out[:, :, :out_w]


def seg_postprocess(result, img_size, output_height, output_width):
    cropped = result[:, : img_size[0], : img_size[1]]
    return bilinear_resize(cropped, output_height, output_width)


def seg_postprocess_pair(inst_seg, stuff_seg, img_size, output_height, output_width):
    """Fuse the inst/stuff resizes into a single pallas_call (concat along C)."""
    ih, iw = img_size
    x = jnp.concatenate([inst_seg[:, :ih, :iw], stuff_seg[:, :ih, :iw]], axis=0)
    y = bilinear_resize(x, output_height, output_width)
    c = inst_seg.shape[0]
    return y[:c], y[c:]


# -----------------------------------------------------------------------------
# Kernel C: generate_instance_output_map
# Sequential grid over score-sorted instances; the output block persists across
# the grid (accumulator, {0,1}, scaled to 255 once at the end).
# Host precomputes keep = (score>=conf) & (class==1) & (area>0), the per-instance
# mask area, and an "effective mask row" that repeats the previous kept instance
# for rejected ones, so the body is skipped (pl.when) AND the mask DMA is elided.
#
# Equivalence notes:
#  * scores are pre-sorted descending, so per-step skip == reference "break".
#  * class==1 / empty-mask gates are hoisted; identical because a rejected
#    instance never mutates seg in the reference either.
#  * when inter == 0, mask*(1-seg) == mask, so no select is needed.
# -----------------------------------------------------------------------------
def _instance_map_kernel(keep_ref, idx_ref, area_ref, mask_ref, seg_ref, *,
                         overlap_threshold):
    i = pl.program_id(0)

    @pl.when(i == 0)
    def _init():
        seg_ref[...] = jnp.zeros_like(seg_ref)

    @pl.when(keep_ref[i] == 1)
    def _update():
        mask_f = (mask_ref[...] != 0).astype(jnp.float32)      # (Hb, Wb)
        seg = seg_ref[...]                                     # {0, 1} accumulator
        inter = jnp.sum(mask_f * seg)                          # single fused XLU reduce
        area_f = area_ref[i].astype(jnp.float32)               # hoisted mask area
        # reference skip: inter / area > thr  ->  apply when inter <= thr * area
        apply = (inter <= overlap_threshold * area_f).astype(jnp.float32)
        # mask & (seg == 0); identical to the raw mask when inter == 0 -> no select.
        # TODO(synk): optionally gate the write in a nested pl.when(apply) to skip
        # the store for overlap-rejected instances.
        seg_ref[...] = seg + apply * (mask_f * (1.0 - seg))

    @pl.when(i == pl.num_programs(0) - 1)
    def _finalize():
        seg_ref[...] = seg_ref[...] * jnp.float32(255.0)


def generate_instance_output_map(scores, pred_classes, pred_masks,
                                 overlap_threshold, instances_confidence_threshold):
    N, H, W = pred_masks.shape

    order = jnp.argsort(-scores)                       # desc sort => per-step skip == break
    scores_s = scores[order].astype(jnp.float32)
    classes_s = pred_classes[order].astype(jnp.int32)
    areas = jnp.sum(pred_masks != 0, axis=(1, 2)).astype(jnp.int32)  # hoisted mask areas
    areas_s = areas[order]

    keep = ((scores_s >= instances_confidence_threshold)
            & (classes_s == 1) & (areas_s > 0)).astype(jnp.int32)
    ar = jnp.arange(N, dtype=jnp.int32)
    # sorted position of the previous kept instance; rejected steps reuse it so
    # the repeated block index elides the HBM->VMEM mask DMA entirely.
    eff_sorted = jnp.maximum(lax.cummax(jnp.where(keep == 1, ar, -1)), 0)
    eff_idx = order[eff_sorted].astype(jnp.int32)      # remap to the original mask row

    if H % 8 == 0 and W % 128 == 0:
        # Aligned: DMA raw pred_masks rows directly — no gather / cast / pad prep
        # pass over all N masks; only kept instances are ever read from HBM.
        masks_in = pred_masks
        Hb, Wb = H, W
    else:
        # Unaligned: lane/sublane-dense int8 buffer (4x less HBM per mask) so the
        # accumulator read-modify-write stays lane-dense.
        Hb, Wb = _round_up(H, 32), _round_up(W, 128)
        masks_in = jnp.zeros((N, Hb, Wb), jnp.int8).at[:, :H, :W].set(
            (pred_masks != 0).astype(jnp.int8))

    kern = functools.partial(_instance_map_kernel,
                             overlap_threshold=float(overlap_threshold))
    seg = pl.pallas_call(
        kern,
        out_shape=jax.ShapeDtypeStruct((Hb, Wb), jnp.float32),
        grid_spec=pltpu.PrefetchScalarGridSpec(
            num_scalar_prefetch=3,
            grid=(N,),
            in_specs=[pl.BlockSpec(
                (None, Hb, Wb),
                lambda i, keep_r, idx_r, area_r: (idx_r[i], 0, 0))],
            out_specs=pl.BlockSpec(
                (Hb, Wb), lambda i, keep_r, idx_r, area_r: (0, 0)),
        ),
        compiler_params=pltpu.CompilerParams(dimension_semantics=("arbitrary",)),
    )(keep, eff_idx, areas_s, masks_in)
    return seg[:H, :W]


# -----------------------------------------------------------------------------
# Inference-time assembly (mirrors generate_instance_saliency_map / forward)
# -----------------------------------------------------------------------------
def generate_instance_saliency_map(batched_inputs, pixel_mean, pixel_std,
                                   overlap_threshold, instances_confidence_threshold):
    # constants prepared once for all images (no per-image rebuild/upload)
    mean_c1 = pixel_mean.astype(jnp.float32).reshape(-1, 1)
    inv_std_c1 = (1.0 / pixel_std.astype(jnp.float32)).reshape(-1, 1)
    results = []
    for inp in batched_inputs:
        # normalizer (applied to the raw image, as in forward())
        normed = normalize_image(inp["image"], mean_c1, inv_std_c1)

        # TODO(synk): backbone / proposal_generator / roi_heads / decoders /
        # detector_postprocess are registry-built; their outputs are synthetic.
        inst_seg_r, stuff_seg_r = seg_postprocess_pair(
            inp["inst_context_seg"], inp["stuff_context_seg"],
            inp["image_size"], inp["height"], inp["width"])

        # The reference computes inst_seg_r.argmax(0) only as a shape provider for
        # zeros_like; the (height, width) shape comes from metadata, so the full
        # cross-channel argmax is dropped.
        sal_map = generate_instance_output_map(
            inp["scores"], inp["pred_classes"], inp["pred_masks"],
            overlap_threshold, instances_confidence_threshold)

        results.append({
            "sal_map": sal_map,
            "inst_con_seg": inst_seg_r,
            "stuff_con_seg": stuff_seg_r,
            "con_seg_ft": inp["con_seg_ft"],
            "refined_con_ft": inp["refined_con_ft"],
            "normalized_image": normed,
        })
    return results


# -----------------------------------------------------------------------------
# numpy references (for correctness checks only)
# -----------------------------------------------------------------------------
def _ref_instance_map(scores, classes, masks, overlap_t, conf_t):
    scores = np.asarray(scores)
    classes = np.asarray(classes)
    masks = np.asarray(masks) > 0
    seg = np.zeros(masks.shape[1:], dtype=np.float32)
    for idx in np.argsort(-scores):
        if scores[idx] < conf_t:
            break
        m = masks[idx].copy()
        ma = m.sum()
        if ma == 0:
            continue
        inter = (m & (seg > 0)).sum()
        if inter * 1.0 / ma > overlap_t:
            continue
        if inter > 0:
            m = m & (seg == 0)
        if classes[idx] == 1:
            seg[m] = 255.0
    return seg


if __name__ == "__main__":
    key = jax.random.PRNGKey(0)
    ks = jax.random.split(key, 4)

    B = 2
    C_img, Hpad, Wpad = 3, 16, 16
    num_seg_classes = 4
    N_inst = 5
    out_h, out_w = 24, 24
    overlap_threshold = 0.5
    conf_threshold = 0.5

    pixel_mean = jnp.array([103.53, 116.28, 123.675], dtype=jnp.float32)
    pixel_std = jnp.array([57.375, 57.12, 58.395], dtype=jnp.float32)

    image_sizes = [(14, 14), (16, 12)]
    batched_inputs = []
    for b in range(B):
        kb = jax.random.split(ks[b], 8)
        batched_inputs.append({
            "image": jax.random.uniform(kb[0], (C_img, Hpad, Wpad), jnp.float32) * 255.0,
            "height": out_h,
            "width": out_w,
            "image_size": image_sizes[b],
            "inst_context_seg": jax.random.normal(kb[1], (num_seg_classes, Hpad, Wpad), jnp.float32),
            "stuff_context_seg": jax.random.normal(kb[2], (num_seg_classes, Hpad, Wpad), jnp.float32),
            "scores": jax.random.uniform(kb[3], (N_inst,), jnp.float32),
            "pred_classes": jax.random.randint(kb[4], (N_inst,), 0, 2).astype(jnp.int32),
            "pred_masks": (jax.random.uniform(kb[5], (N_inst, out_h, out_w), jnp.float32) > 0.6
                           ).astype(jnp.float32),
            "con_seg_ft": jax.random.normal(kb[6], (8, Hpad, Wpad), jnp.float32),
            "refined_con_ft": jax.random.normal(kb[7], (8, Hpad, Wpad), jnp.float32),
        })

    results = generate_instance_saliency_map(
        batched_inputs, pixel_mean, pixel_std, overlap_threshold, conf_threshold)
    results = jax.block_until_ready(results)

    # correctness checks against plain numpy references
    for inp, res in zip(batched_inputs, results):
        x = np.asarray(inp["image"])
        mean = np.asarray(pixel_mean)[:, None, None]
        std = np.asarray(pixel_std)[:, None, None]
        np.testing.assert_allclose(np.asarray(res["normalized_image"]),
                                   (x - mean) / std, rtol=1e-5, atol=1e-5)

        ih, iw = inp["image_size"]
        ry_np = _interp_matrix(inp["height"], ih)
        rx_np = _interp_matrix(inp["width"], iw)
        for key_name, src in (("inst_con_seg", "inst_context_seg"),
                              ("stuff_con_seg", "stuff_context_seg")):
            crop = np.asarray(inp[src])[:, :ih, :iw]
            ref_resize = np.einsum("oh,chw,pw->cop", ry_np, crop, rx_np)
            np.testing.assert_allclose(np.asarray(res[key_name]),
                                       ref_resize, rtol=1e-4, atol=1e-4)

        ref_sal = _ref_instance_map(inp["scores"], inp["pred_classes"], inp["pred_masks"],
                                    overlap_threshold, conf_threshold)
        np.testing.assert_allclose(np.asarray(res["sal_map"]), ref_sal)

    # extra check 1: exercise the Rx-first matmul ordering (strong H-upsample)
    x_small = jax.random.normal(jax.random.PRNGKey(42), (2, 8, 16), jnp.float32)
    y_big = jax.block_until_ready(bilinear_resize(x_small, 64, 96))
    ry_np = _interp_matrix(64, 8)
    rx_np = _interp_matrix(96, 16)
    ref_big = np.einsum("oh,chw,pw->cop", ry_np, np.asarray(x_small), rx_np)
    np.testing.assert_allclose(np.asarray(y_big), ref_big, rtol=1e-4, atol=1e-4)

    # extra check 2: exercise the aligned direct-mask-DMA path of Kernel C
    kk = jax.random.split(jax.random.PRNGKey(7), 3)
    N2, H2, W2 = 6, 32, 128
    sc2 = jax.random.uniform(kk[0], (N2,), jnp.float32)
    cl2 = jax.random.randint(kk[1], (N2,), 0, 2).astype(jnp.int32)
    mk2 = (jax.random.uniform(kk[2], (N2, H2, W2), jnp.float32) > 0.7).astype(jnp.float32)
    seg2 = jax.block_until_ready(generate_instance_output_map(sc2, cl2, mk2, 0.5, 0.3))
    ref2 = _ref_instance_map(sc2, cl2, mk2, 0.5, 0.3)
    np.testing.assert_allclose(np.asarray(seg2), ref2)

    print("KERNEL_OK")
</pallas_src>

<mosaic_0001>
module attributes {stable_mosaic.version = 11 : i64} {
  func.func @_normalize_kernel(%arg0: i32, %arg1: memref<3x256xf32, #tpu.memory_space<vmem>>, %arg2: memref<3x1xf32, #tpu.memory_space<vmem>>, %arg3: memref<3x1xf32, #tpu.memory_space<vmem>>, %arg4: memref<3x256xf32, #tpu.memory_space<vmem>>) attributes {dimension_semantics = [#tpu.dimension_semantics<parallel>], iteration_bounds = array<i64: 1>, scalar_prefetch = 0 : i64, scratch_operands = 0 : i64, tpu.core_type = #tpu.core_type<tc>, window_params = [{transform_indices = @transform_0, window_bounds = array<i64: 3, 256>}, {pipeline_mode = #tpu.pipeline_mode<synchronous>, transform_indices = @transform_1, window_bounds = array<i64: 3, 1>}, {pipeline_mode = #tpu.pipeline_mode<synchronous>, transform_indices = @transform_2, window_bounds = array<i64: 3, 1>}, {transform_indices = @transform_3, window_bounds = array<i64: 3, 256>}]} {
    %c0 = arith.constant 0 : index
    %c0_0 = arith.constant 0 : index
    %0 = vector.load %arg1[%c0, %c0_0] : memref<3x256xf32, #tpu.memory_space<vmem>>, vector<3x256xf32>
    %c0_1 = arith.constant 0 : index
    %c0_2 = arith.constant 0 : index
    %1 = vector.load %arg2[%c0_1, %c0_2] : memref<3x1xf32, #tpu.memory_space<vmem>>, vector<3x1xf32>
    %2 = vector.broadcast %1 : vector<3x1xf32> to vector<3x256xf32>
    %3 = arith.subf %0, %2 : vector<3x256xf32>
    %c0_3 = arith.constant 0 : index
    %c0_4 = arith.constant 0 : index
    %4 = vector.load %arg3[%c0_3, %c0_4] : memref<3x1xf32, #tpu.memory_space<vmem>>, vector<3x1xf32>
    %5 = vector.broadcast %4 : vector<3x1xf32> to vector<3x256xf32>
    %6 = arith.mulf %3, %5 : vector<3x256xf32>
    %c0_5 = arith.constant 0 : index
    %c0_6 = arith.constant 0 : index
    %7 = vector.load %arg4[%c0_5, %c0_6] : memref<3x256xf32, #tpu.memory_space<vmem>>, vector<3x256xf32>
    tpu.vector_store %arg4[%c0_5, %c0_6], %6 {strides = array<i32>} : memref<3x256xf32, #tpu.memory_space<vmem>>, vector<3x256xf32>,
    return
  }
  func.func @transform_0(%arg0: i32) -> (i32, i32) {
    %c0_i32 = arith.constant 0 : i32
    %c0_i32_0 = arith.constant 0 : i32
    return %c0_i32, %arg0 : i32, i32
  }
  func.func @transform_1(%arg0: i32) -> (i32, i32) {
    %c0_i32 = arith.constant 0 : i32
    %c0_i32_0 = arith.constant 0 : i32
    %c0_i32_1 = arith.constant 0 : i32
    return %c0_i32, %c0_i32_0 : i32, i32
  }
  func.func @transform_2(%arg0: i32) -> (i32, i32) {
    %c0_i32 = arith.constant 0 : i32
    %c0_i32_0 = arith.constant 0 : i32
    %c0_i32_1 = arith.constant 0 : i32
    return %c0_i32, %c0_i32_0 : i32, i32
  }
  func.func @transform_3(%arg0: i32) -> (i32, i32) {
    %c0_i32 = arith.constant 0 : i32
    %c0_i32_0 = arith.constant 0 : i32
    return %c0_i32, %arg0 : i32, i32
  }
}

</mosaic_0001>

<llo_original>
// kernel: tpu_custom_call.1
$region0: #{tpu_custom_call.1}
  #allocation0 [shape = 'u32[]', space=smem, size = 0x4, offset = 0x4, fixed_abs, tag = 'smem constant byte address 0x4 - core index']
  #allocation1 [shape = 'u32[144,128]{1,0:T(1,128)}', space=vmem, size = 0x12000, scoped, tag = 'internal scratch']
  %s0 = inlined_call_operand.vmem [shape: f32[3,256], index: 0, kind: input, shape index: {}]
  %s1 = inlined_call_operand.vmem [shape: f32[3,1], index: 1, kind: input, shape index: {}]
  %s2 = inlined_call_operand.vmem [shape: f32[3,1], index: 2, kind: input, shape index: {}]
  %s3 = inlined_call_operand.hbm [shape: f32[3,256], index: 3, kind: output, shape index: {}]
  %s4 = sld [smem:[#allocation0]]
  $region22: #{tpu_custom_call.1} parent=0
    _
  %s6 = ssub.s32 1, %s4
  %s7 = scalar_select 0, %s6, %s4
  $region1: #{tpu_custom_call.1} parent=0
    #allocation2 [shape = 'u8[4096]{0}', space=vmem, size = 0x1000, scoped, tag = 'output window, operand 0, single buffered']
    #allocation3 [shape = 's32[1]{0}', space=sflag, size = 0x4, scoped, tag = 'scoped memory for tpu_custom_call.1']
    %8 = vsyncpa [#allocation3], 0
    // Predicated region
    $region2: #{tpu_custom_call.1} parent=1 // pred_check
      _
    $region3: #{tpu_custom_call.1} parent=1 // pred_check_branch
      %10 = sbr.rel (0) target = $region5
    $region4: #{tpu_custom_call.1} parent=1 // pred_region
      _
    $region5: #{tpu_custom_call.1} parent=1 // pred_fallthru
      _
    // Predicated region
    $region6: #{tpu_custom_call.1} parent=1 // pred_check
      _
    $region7: #{tpu_custom_call.1} parent=1 // pred_check_branch
      %12 = sbr.rel (0) target = $region9
    $region8: #{tpu_custom_call.1} parent=1 // pred_region
      _
    $region9: #{tpu_custom_call.1} parent=1 // pred_fallthru
      _
    // Predicated region
    $region10: #{tpu_custom_call.1} parent=1 // pred_check
      _
    $region11: #{tpu_custom_call.1} parent=1 // pred_check_branch
      %14 = sbr.rel (0) target = $region13
    $region12: #{tpu_custom_call.1} parent=1 // pred_region
      _
    $region13: #{tpu_custom_call.1} parent=1 // pred_fallthru
      _
    %v15 = vld [vmem:[%s0] sm:$0x77]
    %v16 = vld [vmem:[%s1] sm:$0x7]
    %18 = vset.pattern.permute.xlu0 0
    %19 = vperm.xlu0 %18, %v16
    %v20 = vpop.permute.xlu0 %19
    %v22 = vunpack.c.l.s4 839922192
    %v23 = vunpack.c.0.s8 %v22
    %v24 = vlaneseq
    %v25 = vshrl.u32 %v24, 7
    %v26 = vsub.s32 %v23, %v25
    %v27 = vrot.slane %v20, %v26
    %v29 = vsub.f32 %v15, %v27
    %v30 = vld [vmem:[%s2] sm:$0x7]
    %32 = vset.pattern.permute.xlu0 0
    %33 = vperm.xlu0 %32, %v30
    %v34 = vpop.permute.xlu0 %33
    %v36 = vunpack.c.l.s4 839922192
    %v37 = vunpack.c.0.s8 %v36
    %v38 = vlaneseq
    %v39 = vshrl.u32 %v38, 7
    %v40 = vsub.s32 %v37, %v39
    %v41 = vrot.slane %v34, %v40
    %v43 = vmul.f32 %v29, %v41
    %44 = vst [vmem:[#allocation2] sm:$0x77] %v43
    // Predicated region
    $region14: #{tpu_custom_call.1} parent=1 // pred_check
      _
    $region15: #{tpu_custom_call.1} parent=1 // pred_check_branch
      %46 = sbr.rel (0) target = $region17
    $region16: #{tpu_custom_call.1} parent=1 // pred_region
      %s48 = ssub.s32 128, 128
      %49 = vsyncadd [#allocation3], %s48
      %s51 = sshll.u32 [#allocation2], 4
      %s52 = int_to_ptr.vmem [resolvable:$true] %s51
      %54 = dma.vmem_to_hbm [thread:$0]  %s52, 128, %s3, [#allocation3]
    $region17: #{tpu_custom_call.1} parent=1 // pred_fallthru
      _
    // Predicated region
    $region18: #{tpu_custom_call.1} parent=1 // pred_check
      _
    $region19: #{tpu_custom_call.1} parent=1 // pred_check_branch
      %56 = sbr.rel (0) target = $region21
    $region20: #{tpu_custom_call.1} parent=1 // pred_region
      %57 = dma.done [#allocation3], 128
    $region21: #{tpu_custom_call.1} parent=1 // pred_fallthru
      _
    %58 = vsyncpa [#allocation3], 1

</llo_original>
